<compile_context>
chip_gen: v6e
topology: v6e:2x2x1
jax: 0.10.0
libtpu: 0.0.40
codegen_flags: <defaults>
</compile_context>

<pallas_src>
import functools

import jax
import jax.numpy as jnp
from jax.experimental import pallas as pl
from jax.experimental.pallas import tpu as pltpu

ACTION_DIM = 3
HIDDEN_DIM = 128
STATE_DIM = 16          # env.state_dim (=14) + 2 ; synthetic choice
ACTION_PAD = 128        # lane-dense padded action dim
NEG_BIG = -1.0e30       # drives padded logits to ~0 under softmax (f32 only!)


def _num_tensorcores() -> int:
    """v7x has 2 TensorCores per chip; v5e/v6e have 1."""
    try:
        kind = jax.devices()[0].device_kind.lower()
        if "v7" in kind:
            return 2
    except Exception:
        pass
    return 1


def policy_gradient_kernel(x_ref, w1_ref, b1_ref, w2_ref, b2_ref, out_ref):
    # Cast the f32 state tile to bf16 on the VPU (free under the MXU); no wrapper cast.
    x_bf = x_ref[...].astype(jnp.bfloat16)
    # fc: (Bt, S) @ (S, H) on the MXU in bf16, f32 accumulate, f32 bias add.
    h = jnp.dot(x_bf, w1_ref[...], preferred_element_type=jnp.float32) + b1_ref[...]
    # relu(dropout(h)) — dropout is identity at inference; ReLU in f32.
    h = jnp.maximum(h, 0.0)
    # out: (Bt, H) @ (H, 128); padded weight cols are 0, padded bias cols are -1e30 (f32).
    logits = jnp.dot(h.astype(jnp.bfloat16), w2_ref[...],
                     preferred_element_type=jnp.float32) + b2_ref[...]
    # softmax over the lane-dense action axis; padded columns contribute exp(-1e30)=0.
    m = jnp.max(logits, axis=1, keepdims=True)
    e = jnp.exp(logits - m)
    denom = jnp.sum(e, axis=1, keepdims=True)
    out_ref[...] = (e * pl.reciprocal(denom, approx=True)).astype(out_ref.dtype)


def prepare_params(w1, b1, w2, b2):
    """One-time weight prep, hoisted out of the per-call hot path:
    pad the 3-wide head to 128 lanes and cast MXU operands to bf16."""
    A = w2.shape[1]
    w2p = jnp.pad(w2, ((0, 0), (0, ACTION_PAD - A)))
    # NOTE: b2p must stay f32 — the -1e30 pad would become -inf in bf16.
    b2p = jnp.pad(b2, ((0, 0), (0, ACTION_PAD - A)), constant_values=NEG_BIG)
    return (w1.astype(jnp.bfloat16),
            b1.astype(jnp.float32),
            w2p.astype(jnp.bfloat16),
            b2p.astype(jnp.float32))


def pick_block_b(batch: int) -> int:
    """v5e/v6e: one grid step (block_b = padded batch). v7x: two parallel steps,
    one per TensorCore. Cap rows/step at 1024 for large rollout batches."""
    n_tc = _num_tensorcores()
    unit = 8 * n_tc                                   # sublane multiple per core
    b_pad = pl.cdiv(batch, unit) * unit
    return min(b_pad // n_tc, 1024)


@functools.partial(jax.jit, static_argnames=("block_b",))
def policy_gradient_forward_padded(x, w1_bf, b1, w2p_bf, b2p, *, block_b):
    """Hot path: returns the padded, lane-dense (B_pad, 128) bf16 probability slab.
    Consumers that need exactly (B, 3) slice it themselves."""
    B, S = x.shape
    H = w1_bf.shape[1]

    B_pad = pl.cdiv(B, block_b) * block_b
    if B_pad != B:
        x = jnp.pad(x, ((0, B_pad - B), (0, 0)))

    grid = (B_pad // block_b,)
    return pl.pallas_call(
        policy_gradient_kernel,
        out_shape=jax.ShapeDtypeStruct((B_pad, ACTION_PAD), jnp.bfloat16),
        grid=grid,
        in_specs=[
            pl.BlockSpec((block_b, S), lambda i: (i, 0)),       # x tile (f32, cast in-kernel)
            pl.BlockSpec((S, H), lambda i: (0, 0)),             # w1 bf16 (pinned)
            pl.BlockSpec((1, H), lambda i: (0, 0)),             # b1 f32 (pinned)
            pl.BlockSpec((H, ACTION_PAD), lambda i: (0, 0)),    # w2 padded bf16 (pinned)
            pl.BlockSpec((1, ACTION_PAD), lambda i: (0, 0)),    # b2 padded f32 (pinned)
        ],
        out_specs=pl.BlockSpec((block_b, ACTION_PAD), lambda i: (i, 0)),
        compiler_params=pltpu.CompilerParams(
            dimension_semantics=("parallel",)),
    )(x, w1_bf, b1, w2p_bf, b2p)


def init_params(key):
    """Deterministic nn.Linear-style init: U(-1/sqrt(fan_in), 1/sqrt(fan_in))."""
    k1, k2, k3, k4 = jax.random.split(key, 4)
    bound1 = 1.0 / (STATE_DIM ** 0.5)
    bound2 = 1.0 / (HIDDEN_DIM ** 0.5)
    w1 = jax.random.uniform(k1, (STATE_DIM, HIDDEN_DIM), jnp.float32, -bound1, bound1)
    b1 = jax.random.uniform(k2, (1, HIDDEN_DIM), jnp.float32, -bound1, bound1)
    w2 = jax.random.uniform(k3, (HIDDEN_DIM, ACTION_DIM), jnp.float32, -bound2, bound2)
    b2 = jax.random.uniform(k4, (1, ACTION_DIM), jnp.float32, -bound2, bound2)
    return w1, b1, w2, b2


def reference_forward(x, w1, b1, w2, b2):
    """Pure-JAX f32 reference of the PyTorch forward (dropout = identity)."""
    h = jnp.maximum(x @ w1 + b1, 0.0)
    return jax.nn.softmax(h @ w2 + b2, axis=1)


if __name__ == "__main__":
    BATCH = 64   # small rollout batch of states

    key = jax.random.PRNGKey(0)
    kx, kp = jax.random.split(key)
    x = jax.random.normal(kx, (BATCH, STATE_DIM), jnp.float32)
    w1, b1, w2, b2 = init_params(kp)

    # One-time prep (outside the hot path).
    prepared = prepare_params(w1, b1, w2, b2)
    block_b = pick_block_b(BATCH)

    out_padded = policy_gradient_forward_padded(x, *prepared, block_b=block_b)
    jax.block_until_ready(out_padded)

    # Consumer-side view for validation only (not part of the hot path).
    probs = jnp.asarray(out_padded[:BATCH, :ACTION_DIM], jnp.float32)
    assert probs.shape == (BATCH, ACTION_DIM)

    # sanity: softmax rows sum to ~1 (approx-recip + bf16 output tolerance)
    row_sums = jnp.sum(probs, axis=1)
    assert bool(jnp.all(jnp.abs(row_sums - 1.0) < 2e-2)), "row sums off"

    # sanity: padded columns are ~0
    assert float(jnp.max(jnp.abs(jnp.asarray(out_padded[:BATCH, ACTION_DIM:],
                                             jnp.float32)))) < 1e-6

    # sanity: match the pure-JAX f32 reference within bf16/approx-recip tolerance
    ref = reference_forward(x, w1, b1, w2, b2)
    max_err = float(jnp.max(jnp.abs(probs - ref)))
    assert max_err < 5e-2, f"max abs error vs reference too large: {max_err}"

    print("KERNEL_OK")
</pallas_src>

<mosaic_0001>
module attributes {stable_mosaic.version = 11 : i64} {
  func.func @policy_gradient_kernel(%arg0: i32, %arg1: memref<64x16xf32, #tpu.memory_space<vmem>>, %arg2: memref<16x128xbf16, #tpu.memory_space<vmem>>, %arg3: memref<1x128xf32, #tpu.memory_space<vmem>>, %arg4: memref<128x128xbf16, #tpu.memory_space<vmem>>, %arg5: memref<1x128xf32, #tpu.memory_space<vmem>>, %arg6: memref<64x128xbf16, #tpu.memory_space<vmem>>) attributes {dimension_semantics = [#tpu.dimension_semantics<parallel>], iteration_bounds = array<i64: 1>, scalar_prefetch = 0 : i64, scratch_operands = 0 : i64, tpu.core_type = #tpu.core_type<tc>, window_params = [{transform_indices = @transform_0, window_bounds = array<i64: 64, 16>}, {pipeline_mode = #tpu.pipeline_mode<synchronous>, transform_indices = @transform_1, window_bounds = array<i64: 16, 128>}, {pipeline_mode = #tpu.pipeline_mode<synchronous>, transform_indices = @transform_2, window_bounds = array<i64: 1, 128>}, {pipeline_mode = #tpu.pipeline_mode<synchronous>, transform_indices = @transform_3, window_bounds = array<i64: 128, 128>}, {pipeline_mode = #tpu.pipeline_mode<synchronous>, transform_indices = @transform_4, window_bounds = array<i64: 1, 128>}, {transform_indices = @transform_5, window_bounds = array<i64: 64, 128>}]} {
    %c0 = arith.constant 0 : index
    %c0_0 = arith.constant 0 : index
    %0 = vector.load %arg1[%c0, %c0_0] : memref<64x16xf32, #tpu.memory_space<vmem>>, vector<64x16xf32>
    %1 = arith.truncf %0 : vector<64x16xf32> to vector<64x16xbf16>
    %c0_1 = arith.constant 0 : index
    %c0_2 = arith.constant 0 : index
    %2 = vector.load %arg2[%c0_1, %c0_2] : memref<16x128xbf16, #tpu.memory_space<vmem>>, vector<16x128xbf16>
    %cst = arith.constant dense<0.000000e+00> : vector<64x128xf32>
    %3 = tpu.matmul %1, %2, %cst {dimension_numbers = #tpu.dot_dimension_numbers<[1], [0], [0], [1], [0, 0, 1, 1], [], []>} : vector<64x16xbf16>, vector<16x128xbf16>, vector<64x128xf32> -> vector<64x128xf32>
    %c0_3 = arith.constant 0 : index
    %c0_4 = arith.constant 0 : index
    %4 = vector.load %arg3[%c0_3, %c0_4] : memref<1x128xf32, #tpu.memory_space<vmem>>, vector<1x128xf32>
    %5 = vector.broadcast %4 : vector<1x128xf32> to vector<64x128xf32>
    %6 = arith.addf %3, %5 : vector<64x128xf32>
    %cst_5 = arith.constant 0.000000e+00 : f32
    %7 = vector.broadcast %cst_5 : f32 to vector<64x128xf32>
    %8 = arith.maximumf %6, %7 : vector<64x128xf32>
    %9 = arith.truncf %8 : vector<64x128xf32> to vector<64x128xbf16>
    %c0_6 = arith.constant 0 : index
    %c0_7 = arith.constant 0 : index
    %10 = vector.load %arg4[%c0_6, %c0_7] : memref<128x128xbf16, #tpu.memory_space<vmem>>, vector<128x128xbf16>
    %cst_8 = arith.constant dense<0.000000e+00> : vector<64x128xf32>
    %11 = tpu.matmul %9, %10, %cst_8 {dimension_numbers = #tpu.dot_dimension_numbers<[1], [0], [0], [1], [0, 0, 1, 1], [], []>} : vector<64x128xbf16>, vector<128x128xbf16>, vector<64x128xf32> -> vector<64x128xf32>
    %c0_9 = arith.constant 0 : index
    %c0_10 = arith.constant 0 : index
    %12 = vector.load %arg5[%c0_9, %c0_10] : memref<1x128xf32, #tpu.memory_space<vmem>>, vector<1x128xf32>
    %13 = vector.broadcast %12 : vector<1x128xf32> to vector<64x128xf32>
    %14 = arith.addf %11, %13 : vector<64x128xf32>
    %cst_11 = arith.constant dense<0xFF800000> : vector<64xf32>
    %15 = vector.multi_reduction <maximumf>, %14, %cst_11 [1] : vector<64x128xf32> to vector<64xf32>
    %16 = vector.shape_cast %15 : vector<64xf32> to vector<64x1xf32>
    %17 = vector.broadcast %16 : vector<64x1xf32> to vector<64x128xf32>
    %18 = arith.subf %14, %17 : vector<64x128xf32>
    %19 = math.exp %18 : vector<64x128xf32>
    %cst_12 = arith.constant dense<0.000000e+00> : vector<64xf32>
    %20 = vector.multi_reduction <add>, %19, %cst_12 [1] : vector<64x128xf32> to vector<64xf32>
    %21 = vector.shape_cast %20 : vector<64xf32> to vector<64x1xf32>
    %22 = tpu.reciprocal %21 {approx = true} : vector<64x1xf32> -> vector<64x1xf32>
    %23 = vector.broadcast %22 : vector<64x1xf32> to vector<64x128xf32>
    %24 = arith.mulf %19, %23 : vector<64x128xf32>
    %25 = arith.truncf %24 : vector<64x128xf32> to vector<64x128xbf16>
    %c0_13 = arith.constant 0 : index
    %c0_14 = arith.constant 0 : index
    %26 = vector.load %arg6[%c0_13, %c0_14] : memref<64x128xbf16, #tpu.memory_space<vmem>>, vector<64x128xbf16>
    tpu.vector_store %arg6[%c0_13, %c0_14], %25 {strides = array<i32>} : memref<64x128xbf16, #tpu.memory_space<vmem>>, vector<64x128xbf16>,
    return
  }
  func.func @transform_0(%arg0: i32) -> (i32, i32) {
    %c0_i32 = arith.constant 0 : i32
    %c0_i32_0 = arith.constant 0 : i32
    return %arg0, %c0_i32 : i32, i32
  }
  func.func @transform_1(%arg0: i32) -> (i32, i32) {
    %c0_i32 = arith.constant 0 : i32
    %c0_i32_0 = arith.constant 0 : i32
    %c0_i32_1 = arith.constant 0 : i32
    return %c0_i32, %c0_i32_0 : i32, i32
  }
  func.func @transform_2(%arg0: i32) -> (i32, i32) {
    %c0_i32 = arith.constant 0 : i32
    %c0_i32_0 = arith.constant 0 : i32
    %c0_i32_1 = arith.constant 0 : i32
    return %c0_i32, %c0_i32_0 : i32, i32
  }
  func.func @transform_3(%arg0: i32) -> (i32, i32) {
    %c0_i32 = arith.constant 0 : i32
    %c0_i32_0 = arith.constant 0 : i32
    %c0_i32_1 = arith.constant 0 : i32
    return %c0_i32, %c0_i32_0 : i32, i32
  }
  func.func @transform_4(%arg0: i32) -> (i32, i32) {
    %c0_i32 = arith.constant 0 : i32
    %c0_i32_0 = arith.constant 0 : i32
    %c0_i32_1 = arith.constant 0 : i32
    return %c0_i32, %c0_i32_0 : i32, i32
  }
  func.func @transform_5(%arg0: i32) -> (i32, i32) {
    %c0_i32 = arith.constant 0 : i32
    %c0_i32_0 = arith.constant 0 : i32
    return %arg0, %c0_i32 : i32, i32
  }
}

</mosaic_0001>

<llo_original>
// kernel: policy_gradient_forward_padded.1
$region0: #{policy_gradient_forward_padded.1}
  #allocation0 [shape = 'u32[]', space=smem, size = 0x4, offset = 0x4, fixed_abs, tag = 'smem constant byte address 0x4 - core index']
  #allocation1 [shape = 'u32[144,128]{1,0:T(1,128)}', space=vmem, size = 0x12000, scoped, tag = 'internal scratch']
  %s0 = inlined_call_operand.vmem [shape: f32[64,16], index: 0, kind: input, shape index: {}]
  %s1 = inlined_call_operand.vmem [shape: bf16[16,128], index: 1, kind: input, shape index: {}]
  %s2 = inlined_call_operand.vmem [shape: f32[1,128], index: 2, kind: input, shape index: {}]
  %s3 = inlined_call_operand.vmem [shape: bf16[128,128], index: 3, kind: input, shape index: {}]
  %s4 = inlined_call_operand.vmem [shape: f32[1,128], index: 4, kind: input, shape index: {}]
  %s5 = inlined_call_operand.hbm [shape: bf16[64,128], index: 5, kind: output, shape index: {}]
  %s6 = sld [smem:[#allocation0]]
  $region30: #{policy_gradient_forward_padded.1} parent=0
    _
  %s8 = ssub.s32 1, %s6
  %s9 = scalar_select 0, %s8, %s6
  $region1: #{policy_gradient_forward_padded.1} parent=0
    #allocation2 [shape = 'u8[16384]{0}', space=vmem, size = 0x4000, scoped, tag = 'output window, operand 0, single buffered']
    #allocation3 [shape = 's32[1]{0}', space=sflag, size = 0x4, scoped, tag = 'scoped memory for policy_gradient_forward_padded.1']
    %10 = vsyncpa [#allocation3], 0
    // Predicated region
    $region2: #{policy_gradient_forward_padded.1} parent=1 // pred_check
      _
    $region3: #{policy_gradient_forward_padded.1} parent=1 // pred_check_branch
      %12 = sbr.rel (0) target = $region5
    $region4: #{policy_gradient_forward_padded.1} parent=1 // pred_region
      _
    $region5: #{policy_gradient_forward_padded.1} parent=1 // pred_fallthru
      _
    // Predicated region
    $region6: #{policy_gradient_forward_padded.1} parent=1 // pred_check
      _
    $region7: #{policy_gradient_forward_padded.1} parent=1 // pred_check_branch
      %14 = sbr.rel (0) target = $region9
    $region8: #{policy_gradient_forward_padded.1} parent=1 // pred_region
      _
    $region9: #{policy_gradient_forward_padded.1} parent=1 // pred_fallthru
      _
    // Predicated region
    $region10: #{policy_gradient_forward_padded.1} parent=1 // pred_check
      _
    $region11: #{policy_gradient_forward_padded.1} parent=1 // pred_check_branch
      %16 = sbr.rel (0) target = $region13
    $region12: #{policy_gradient_forward_padded.1} parent=1 // pred_region
      _
    $region13: #{policy_gradient_forward_padded.1} parent=1 // pred_fallthru
      _
    // Predicated region
    $region14: #{policy_gradient_forward_padded.1} parent=1 // pred_check
      _
    $region15: #{policy_gradient_forward_padded.1} parent=1 // pred_check_branch
      %18 = sbr.rel (0) target = $region17
    $region16: #{policy_gradient_forward_padded.1} parent=1 // pred_region
      _
    $region17: #{policy_gradient_forward_padded.1} parent=1 // pred_fallthru
      _
    // Predicated region
    $region18: #{policy_gradient_forward_padded.1} parent=1 // pred_check
      _
    $region19: #{policy_gradient_forward_padded.1} parent=1 // pred_check_branch
      %20 = sbr.rel (0) target = $region21
    $region20: #{policy_gradient_forward_padded.1} parent=1 // pred_region
      _
    $region21: #{policy_gradient_forward_padded.1} parent=1 // pred_fallthru
      _
    %v22 = vld [vmem:[%s0] sm:$0xff]
    %v23 = vld [vmem:[%s0 + $0x8] sm:$0xff]
    %v24 = vld [vmem:[%s0 + $0x10] sm:$0xff]
    %v25 = vld [vmem:[%s0 + $0x18] sm:$0xff]
    %v26 = vld [vmem:[%s0 + $0x20] sm:$0xff]
    %v27 = vld [vmem:[%s0 + $0x28] sm:$0xff]
    %v28 = vld [vmem:[%s0 + $0x30] sm:$0xff]
    %v29 = vld [vmem:[%s0 + $0x38] sm:$0xff]
    %v30 = vpack.c.bf16 %v23, %v22
    %v31 = vpack.c.bf16 %v25, %v24
    %v32 = vpack.c.bf16 %v27, %v26
    %v33 = vpack.c.bf16 %v29, %v28
    %v34 = vld [vmem:[%s1] sm:$0xf]
    %v35 = vld [vmem:[%s1 + $0x4] sm:$0xf]
    %v36 = vld [vmem:[%s2] sm:$0x1]
    %v38 = vlaneseq
    %v39 = vshrl.u32 %v38, 7
    %v40 = vsub.s32 0, %v39
    %v41 = vrot.slane %v36, %v40
    %v45 = vunpack.c.l.b16 %v34
    %v46 = vunpack.c.l.b16 %v35
    %v47 = vpack.c.b16 %v46, %v45
    %vm49 = vcmask 130048
    %v51 = vsel %vm49, %v30, 0
    %v54 = vsel %vm49, %v31, 0
    %v57 = vsel %vm49, %v32, 0
    %v60 = vsel %vm49, %v33, 0
    %62 = vmatprep.subr.bf16.mxu0 0
    %63 = vmatpush1.bf16.msra.mxu0 0
    %64 = vmatprep.subr.bf16.mxu0 0
    %65 = vmatpush1.bf16.msra.mxu0 0
    %66 = vmatprep.subr.bf16.mxu0 0
    %67 = vmatpush1.bf16.msra.mxu0 0
    %68 = vmatprep.subr.bf16.mxu0 0
    %69 = vmatpush1.bf16.msra.mxu0 0
    %70 = vmatprep.subr.bf16.mxu0 0
    %71 = vmatpush1.bf16.msra.mxu0 0
    %72 = vmatprep.subr.bf16.mxu0 0
    %73 = vmatpush1.bf16.msra.mxu0 0
    %74 = vmatprep.subr.bf16.mxu0 0
    %75 = vmatpush1.bf16.msra.mxu0 0
    %76 = vmatprep.subr.bf16.mxu0 0
    %77 = vmatpush1.bf16.msra.mxu0 %v47
    %78 = vmatprep.subr.bf16.mxu0 0
    %79 = vmatpush2.bf16.msra.mxu0 0
    %80 = vmatprep.subr.bf16.mxu0 0
    %81 = vmatpush2.bf16.msra.mxu0 0
    %82 = vmatprep.subr.bf16.mxu0 0
    %83 = vmatpush2.bf16.msra.mxu0 0
    %84 = vmatprep.subr.bf16.mxu0 0
    %85 = vmatpush2.bf16.msra.mxu0 0
    %86 = vmatprep.subr.bf16.mxu0 0
    %87 = vmatpush2.bf16.msra.mxu0 0
    %88 = vmatprep.subr.bf16.mxu0 0
    %89 = vmatpush2.bf16.msra.mxu0 0
    %90 = vmatprep.subr.bf16.mxu0 0
    %91 = vmatpush2.bf16.msra.mxu0 0
    %92 = vmatprep.subr.bf16.mxu0 0
    %93 = vmatpush2.bf16.msra.mxu0 0
    %94 = vmatprep.mubr.bf16.mxu0 0
    %95 = vmatmul.mubr.bf16.gmra.mxu0 %v51
    %v96 = vpop.f32.mrf.mxu0
    %v97 = vadd.f32 %v41, %v96
    %v98 = vpop.f32.mrf.mxu0
    %v99 = vpop.f32.mrf.mxu0
    %v100 = vadd.f32 %v41, %v99
    %v101 = vpop.f32.mrf.mxu0
    %102 = vmatprep.mubr.bf16.mxu0 0
    %103 = vmatmul.mubr.bf16.gmra.mxu0 %v54
    %v104 = vpop.f32.mrf.mxu0
    %v105 = vadd.f32 %v41, %v104
    %v106 = vpop.f32.mrf.mxu0
    %v107 = vpop.f32.mrf.mxu0
    %v108 = vadd.f32 %v41, %v107
    %v109 = vpop.f32.mrf.mxu0
    %110 = vmatprep.mubr.bf16.mxu0 0
    %111 = vmatmul.mubr.bf16.gmra.mxu0 %v57
    %v112 = vpop.f32.mrf.mxu0
    %v113 = vadd.f32 %v41, %v112
    %v114 = vpop.f32.mrf.mxu0
    %v115 = vpop.f32.mrf.mxu0
    %v116 = vadd.f32 %v41, %v115
    %v117 = vpop.f32.mrf.mxu0
    %118 = vmatprep.mubr.bf16.mxu0 0
    %119 = vmatmul.mubr.bf16.gmra.mxu0 %v60
    %v120 = vpop.f32.mrf.mxu0
    %v121 = vadd.f32 %v41, %v120
    %v122 = vpop.f32.mrf.mxu0
    %v123 = vpop.f32.mrf.mxu0
    %v124 = vadd.f32 %v41, %v123
    %v125 = vpop.f32.mrf.mxu0
    %126 = vdwg.mxu0
    %v127 = vmax.f32 %v97, 0.0
    %v128 = vmax.f32 %v100, 0.0
    %v129 = vmax.f32 %v105, 0.0
    %v130 = vmax.f32 %v108, 0.0
    %v131 = vmax.f32 %v113, 0.0
    %v132 = vmax.f32 %v116, 0.0
    %v133 = vmax.f32 %v121, 0.0
    %v134 = vmax.f32 %v124, 0.0
    %v135 = vpack.c.bf16 %v128, %v127
    %v136 = vpack.c.bf16 %v130, %v129
    %v137 = vpack.c.bf16 %v132, %v131
    %v138 = vpack.c.bf16 %v134, %v133
    %v139 = vld [vmem:[%s3] sm:$0xf]
    %v140 = vld [vmem:[%s3 + $0x4] sm:$0xf]
    %v141 = vld [vmem:[%s3 + $0x8] sm:$0xf]
    %v142 = vld [vmem:[%s3 + $0xc] sm:$0xf]
    %v143 = vld [vmem:[%s3 + $0x10] sm:$0xf]
    %v144 = vld [vmem:[%s3 + $0x14] sm:$0xf]
    %v145 = vld [vmem:[%s3 + $0x18] sm:$0xf]
    %v146 = vld [vmem:[%s3 + $0x1c] sm:$0xf]
    %v147 = vld [vmem:[%s3 + $0x20] sm:$0xf]
    %v148 = vld [vmem:[%s3 + $0x24] sm:$0xf]
    %v149 = vld [vmem:[%s3 + $0x28] sm:$0xf]
    %v150 = vld [vmem:[%s3 + $0x2c] sm:$0xf]
    %v151 = vld [vmem:[%s3 + $0x30] sm:$0xf]
    %v152 = vld [vmem:[%s3 + $0x34] sm:$0xf]
    %v153 = vld [vmem:[%s3 + $0x38] sm:$0xf]
    %v154 = vld [vmem:[%s3 + $0x3c] sm:$0xf]
    %v155 = vld [vmem:[%s4] sm:$0x1]
    %v157 = vlaneseq
    %v158 = vshrl.u32 %v157, 7
    %v159 = vsub.s32 0, %v158
    %v160 = vrot.slane %v155, %v159
    %v178 = vunpack.c.l.b16 %v139
    %v179 = vunpack.c.l.b16 %v140
    %v180 = vunpack.c.l.b16 %v141
    %v181 = vunpack.c.l.b16 %v142
    %v182 = vunpack.c.l.b16 %v143
    %v183 = vunpack.c.l.b16 %v144
    %v184 = vunpack.c.l.b16 %v145
    %v185 = vunpack.c.l.b16 %v146
    %v186 = vunpack.c.l.b16 %v147
    %v187 = vunpack.c.l.b16 %v148
    %v188 = vunpack.c.l.b16 %v149
    %v189 = vunpack.c.l.b16 %v150
    %v190 = vunpack.c.l.b16 %v151
    %v191 = vunpack.c.l.b16 %v152
    %v192 = vunpack.c.l.b16 %v153
    %v193 = vunpack.c.l.b16 %v154
    %v194 = vpack.c.b16 %v179, %v178
    %v195 = vpack.c.b16 %v181, %v180
    %v196 = vpack.c.b16 %v183, %v182
    %v197 = vpack.c.b16 %v185, %v184
    %v198 = vpack.c.b16 %v187, %v186
    %v199 = vpack.c.b16 %v189, %v188
    %v200 = vpack.c.b16 %v191, %v190
    %v201 = vpack.c.b16 %v193, %v192
    %210 = vmatprep.subr.bf16.mxu0 0
    %211 = vmatpush1.bf16.msra.mxu0 %v201
    %212 = vmatprep.subr.bf16.mxu0 0
    %213 = vmatpush1.bf16.msra.mxu0 %v200
    %214 = vmatprep.subr.bf16.mxu0 0
    %215 = vmatpush1.bf16.msra.mxu0 %v199
    %216 = vmatprep.subr.bf16.mxu0 0
    %217 = vmatpush1.bf16.msra.mxu0 %v198
    %218 = vmatprep.subr.bf16.mxu0 0
    %219 = vmatpush1.bf16.msra.mxu0 %v197
    %220 = vmatprep.subr.bf16.mxu0 0
    %221 = vmatpush1.bf16.msra.mxu0 %v196
    %222 = vmatprep.subr.bf16.mxu0 0
    %223 = vmatpush1.bf16.msra.mxu0 %v195
    %224 = vmatprep.subr.bf16.mxu0 0
    %225 = vmatpush1.bf16.msra.mxu0 %v194
    %226 = vmatprep.subr.bf16.mxu0 0
    %227 = vmatpush2.bf16.msra.mxu0 0
    %228 = vmatprep.subr.bf16.mxu0 0
    %229 = vmatpush2.bf16.msra.mxu0 0
    %230 = vmatprep.subr.bf16.mxu0 0
    %231 = vmatpush2.bf16.msra.mxu0 0
    %232 = vmatprep.subr.bf16.mxu0 0
    %233 = vmatpush2.bf16.msra.mxu0 0
    %234 = vmatprep.subr.bf16.mxu0 0
    %235 = vmatpush2.bf16.msra.mxu0 0
    %236 = vmatprep.subr.bf16.mxu0 0
    %237 = vmatpush2.bf16.msra.mxu0 0
    %238 = vmatprep.subr.bf16.mxu0 0
    %239 = vmatpush2.bf16.msra.mxu0 0
    %240 = vmatprep.subr.bf16.mxu0 0
    %241 = vmatpush2.bf16.msra.mxu0 0
    %242 = vmatprep.mubr.bf16.mxu0 0
    %243 = vmatmul.mubr.bf16.gmra.mxu0 %v135
    %v244 = vpop.f32.mrf.mxu0
    %v245 = vadd.f32 %v160, %v244
    %v246 = vpop.f32.mrf.mxu0
    %v247 = vpop.f32.mrf.mxu0
    %v248 = vadd.f32 %v160, %v247
    %v249 = vpop.f32.mrf.mxu0
    %250 = vmatprep.mubr.bf16.mxu0 0
    %251 = vmatmul.mubr.bf16.gmra.mxu0 %v136
    %v252 = vpop.f32.mrf.mxu0
    %v253 = vadd.f32 %v160, %v252
    %v254 = vpop.f32.mrf.mxu0
    %v255 = vpop.f32.mrf.mxu0
    %v256 = vadd.f32 %v160, %v255
    %v257 = vpop.f32.mrf.mxu0
    %258 = vmatprep.mubr.bf16.mxu0 0
    %259 = vmatmul.mubr.bf16.gmra.mxu0 %v137
    %v260 = vpop.f32.mrf.mxu0
    %v261 = vadd.f32 %v160, %v260
    %v262 = vpop.f32.mrf.mxu0
    %v263 = vpop.f32.mrf.mxu0
    %v264 = vadd.f32 %v160, %v263
    %v265 = vpop.f32.mrf.mxu0
    %266 = vmatprep.mubr.bf16.mxu0 0
    %267 = vmatmul.mubr.bf16.gmra.mxu0 %v138
    %v268 = vpop.f32.mrf.mxu0
    %v269 = vadd.f32 %v160, %v268
    %v270 = vpop.f32.mrf.mxu0
    %v271 = vpop.f32.mrf.mxu0
    %v272 = vadd.f32 %v160, %v271
    %v273 = vpop.f32.mrf.mxu0
    %274 = vdwg.mxu0
    %275 = vmax.xlane.f32.xlu0 %v245
    %v276 = vpop.xlane.xlu0 %275
    %277 = vmax.xlane.f32.xlu0 %v248
    %v278 = vpop.xlane.xlu0 %277
    %279 = vmax.xlane.f32.xlu0 %v253
    %v280 = vpop.xlane.xlu0 %279
    %281 = vmax.xlane.f32.xlu0 %v256
    %v282 = vpop.xlane.xlu0 %281
    %283 = vmax.xlane.f32.xlu0 %v261
    %v284 = vpop.xlane.xlu0 %283
    %285 = vmax.xlane.f32.xlu0 %v264
    %v286 = vpop.xlane.xlu0 %285
    %287 = vmax.xlane.f32.xlu0 %v269
    %v288 = vpop.xlane.xlu0 %287
    %289 = vmax.xlane.f32.xlu0 %v272
    %v290 = vpop.xlane.xlu0 %289
    %v291 = vsub.f32 %v245, %v276
    %v292 = vsub.f32 %v248, %v278
    %v293 = vsub.f32 %v253, %v280
    %v294 = vsub.f32 %v256, %v282
    %v295 = vsub.f32 %v261, %v284
    %v296 = vsub.f32 %v264, %v286
    %v297 = vsub.f32 %v269, %v288
    %v298 = vsub.f32 %v272, %v290
    %v299 = vmul.f32 %v291, 1.442695
    %v300 = vpow.pop %v299
    %v301 = vmul.f32 %v292, 1.442695
    %v302 = vpow.pop %v301
    %v303 = vmul.f32 %v293, 1.442695
    %v304 = vpow.pop %v303
    %v305 = vmul.f32 %v294, 1.442695
    %v306 = vpow.pop %v305
    %v307 = vmul.f32 %v295, 1.442695
    %v308 = vpow.pop %v307
    %v309 = vmul.f32 %v296, 1.442695
    %v310 = vpow.pop %v309
    %v311 = vmul.f32 %v297, 1.442695
    %v312 = vpow.pop %v311
    %v313 = vmul.f32 %v298, 1.442695
    %v314 = vpow.pop %v313
    %315 = vadd.xlane.f32.xlu0 %v300
    %v316 = vpop.xlane.xlu0 %315
    %317 = vadd.xlane.f32.xlu0 %v302
    %v318 = vpop.xlane.xlu0 %317
    %319 = vadd.xlane.f32.xlu0 %v304
    %v320 = vpop.xlane.xlu0 %319
    %321 = vadd.xlane.f32.xlu0 %v306
    %v322 = vpop.xlane.xlu0 %321
    %323 = vadd.xlane.f32.xlu0 %v308
    %v324 = vpop.xlane.xlu0 %323
    %325 = vadd.xlane.f32.xlu0 %v310
    %v326 = vpop.xlane.xlu0 %325
    %327 = vadd.xlane.f32.xlu0 %v312
    %v328 = vpop.xlane.xlu0 %327
    %329 = vadd.xlane.f32.xlu0 %v314
    %v330 = vpop.xlane.xlu0 %329
    %v331 = vrcp.pop %v316
    %v332 = vrcp.pop %v318
    %v333 = vrcp.pop %v320
    %v334 = vrcp.pop %v322
    %v335 = vrcp.pop %v324
    %v336 = vrcp.pop %v326
    %v337 = vrcp.pop %v328
    %v338 = vrcp.pop %v330
    %v339 = vmul.f32 %v300, %v331
    %v340 = vmul.f32 %v302, %v332
    %v341 = vmul.f32 %v304, %v333
    %v342 = vmul.f32 %v306, %v334
    %v343 = vmul.f32 %v308, %v335
    %v344 = vmul.f32 %v310, %v336
    %v345 = vmul.f32 %v312, %v337
    %v346 = vmul.f32 %v314, %v338
    %v347 = vpack.c.bf16 %v340, %v339
    %v348 = vpack.c.bf16 %v342, %v341
    %v349 = vpack.c.bf16 %v344, %v343
    %v350 = vpack.c.bf16 %v346, %v345
    %v355 = vunpack.c.l.b16 %v347
    %v356 = vunpack.c.h.b16 %v347
    %v357 = vunpack.c.l.b16 %v348
    %v358 = vunpack.c.h.b16 %v348
    %v359 = vunpack.c.l.b16 %v349
    %v360 = vunpack.c.h.b16 %v349
    %v361 = vunpack.c.l.b16 %v350
    %v362 = vunpack.c.h.b16 %v350
    %v363 = vpack.c.b16 %v355, %v355
    %v364 = vpack.c.b16 %v356, %v356
    %v365 = vpack.c.b16 %v357, %v357
    %v366 = vpack.c.b16 %v358, %v358
    %v367 = vpack.c.b16 %v359, %v359
    %v368 = vpack.c.b16 %v360, %v360
    %v369 = vpack.c.b16 %v361, %v361
    %v370 = vpack.c.b16 %v362, %v362
    %379 = vst [vmem:[#allocation2] sm:$0xf] %v363
    %380 = vst [vmem:[#allocation2 + $0x4] sm:$0xf] %v364
    %381 = vst [vmem:[#allocation2 + $0x8] sm:$0xf] %v365
    %382 = vst [vmem:[#allocation2 + $0xc] sm:$0xf] %v366
    %383 = vst [vmem:[#allocation2 + $0x10] sm:$0xf] %v367
    %384 = vst [vmem:[#allocation2 + $0x14] sm:$0xf] %v368
    %385 = vst [vmem:[#allocation2 + $0x18] sm:$0xf] %v369
    %386 = vst [vmem:[#allocation2 + $0x1c] sm:$0xf] %v370
    // Predicated region
    $region22: #{policy_gradient_forward_padded.1} parent=1 // pred_check
      _
    $region23: #{policy_gradient_forward_padded.1} parent=1 // pred_check_branch
      %388 = sbr.rel (0) target = $region25
    $region24: #{policy_gradient_forward_padded.1} parent=1 // pred_region
      %s390 = ssub.s32 512, 512
      %391 = vsyncadd [#allocation3], %s390
      %s392 = sshll.u32 [#allocation2], 4
      %s393 = int_to_ptr.vmem [resolvable:$true] %s392
      %398 = dma.vmem_to_hbm [thread:$0]  %s393, 512, %s5, [#allocation3], 64, 64, 4
    $region25: #{policy_gradient_forward_padded.1} parent=1 // pred_fallthru
      _
    // Predicated region
    $region26: #{policy_gradient_forward_padded.1} parent=1 // pred_check
      _
    $region27: #{policy_gradient_forward_padded.1} parent=1 // pred_check_branch
      %400 = sbr.rel (0) target = $region29
    $region28: #{policy_gradient_forward_padded.1} parent=1 // pred_region
      %401 = dma.done [#allocation3], 512
    $region29: #{policy_gradient_forward_padded.1} parent=1 // pred_fallthru
      _
    %402 = vsyncpa [#allocation3], 1

</llo_original>
